<compile_context>
chip_gen: v7x
topology: tpu7x:2x2x1
jax: 0.10.0
libtpu: 0.0.40
codegen_flags: <defaults>
</compile_context>

<pallas_src>
import jax
import jax.numpy as jnp
from jax.experimental import pallas as pl
from jax.experimental.pallas import tpu as pltpu

BN_EPS = 1e-5


# ----------------------------------------------------------------------------
# Fused forward kernel
# ----------------------------------------------------------------------------
def _fused_forward_kernel(x_ref, w1_ref, t1_ref, w2_ref, t2_ref,
                          wf1_ref, bf1_ref, wf2_ref, b2_ref,
                          out_ref, s0, s1, h1s, s2):
    f32 = jnp.float32
    B, L, _ = x_ref.shape            # x: (B, L, Cin) -- length on sublanes, chans on lanes
    Lh, Lq = L // 2, L // 4
    S0 = L + 4                       # per-sample segment stride, stage 1 (pad + slack)
    S1 = S0 // 2                     # per-sample segment stride, stage 2
    W0 = B * S0                      # flat stage-1 width (rows of s0)
    Wy1 = W0 - 2                     # rows of conv1 output (valid conv over flat axis)
    Wp1 = Wy1 // 2                   # rows of pool1 output
    Wy2 = B * S1 - 2                 # rows of conv2 output

    # ---- Stage padded conv1 input in VMEM: segment b = [0 | x_b (L rows) | 0 | slack].
    s0[...] = jnp.zeros(s0.shape, f32)
    for b in range(B):               # B is tiny & static; unrolled staging copies
        s0[b * S0 + 1: b * S0 + 1 + L, :] = x_ref[b]

    # ---- Conv1: one im2col matmul over all samples (K = 3*Cin) + BN shift + ReLU.
    cols1 = jnp.concatenate([s0[k: k + Wy1, :] for k in range(3)], axis=1)
    y1 = jnp.dot(cols1, w1_ref[...], preferred_element_type=f32)         # (Wy1, C1)
    y1 = jnp.maximum(y1 + t1_ref[...], 0.0)
    s1[0:Wy1, :] = y1

    # ---- MaxPool1d(2): max of even/odd sublane-strided reads; restage padded segments.
    p1 = jnp.maximum(s1[pl.ds(0, Wp1, stride=2), :],
                     s1[pl.ds(1, Wp1, stride=2), :])                     # (Wp1, C1)
    h1s[...] = jnp.zeros(h1s.shape, f32)
    for b in range(B):
        h1s[b * S1 + 1: b * S1 + 1 + Lh, :] = p1[b * S1: b * S1 + Lh, :]

    # ---- Conv2: one im2col matmul (K = 3*C1) + BN shift + ReLU.
    cols2 = jnp.concatenate([h1s[k: k + Wy2, :] for k in range(3)], axis=1)
    y2 = jnp.dot(cols2, w2_ref[...], preferred_element_type=f32)         # (Wy2, C2)
    y2 = jnp.maximum(y2 + t2_ref[...], 0.0)
    s2[0:Wy2, :] = y2

    # ---- MaxPool1d(2) fused with the channel-major flatten gather:
    #      cols3[b, q*C2 + c] = max(y2[b*S1 + 2q, c], y2[b*S1 + 2q + 1, c]).
    cols3 = jnp.concatenate(
        [jnp.maximum(s2[pl.ds(2 * q, B, stride=S1), :],
                     s2[pl.ds(2 * q + 1, B, stride=S1), :]) for q in range(Lq)],
        axis=1)                                                          # (B, Lq*C2)

    # ---- FC1 + ReLU (fc1 weight columns pre-permuted in the wrapper to match cols3).
    z = jnp.dot(cols3, wf1_ref[...], preferred_element_type=f32) + bf1_ref[...]
    z = jnp.maximum(z, 0.0)                                              # (B, H)

    # ---- FC2 as VPU multiply + lane (XLU) reduction; scalar bias from SMEM.
    out_ref[...] = jnp.sum(z * wf2_ref[...], axis=1, keepdims=True) + b2_ref[0, 0]


# ----------------------------------------------------------------------------
# Wrapper: fold BN into weights, permute weights for im2col/flatten, call kernel
# ----------------------------------------------------------------------------
def _fold_bn(gamma, beta, mean, var, conv_bias):
    scale = gamma / jnp.sqrt(var + BN_EPS)
    shift = beta + scale * (conv_bias - mean)
    return scale, shift


def cnn_regressor_forward(x, p):
    """x: (B, 1, L) float32 -> (B, 1) float32 (inference-mode BatchNorm)."""
    B, Cin, L = x.shape
    assert L % 4 == 0, "two MaxPool1d(2) stages require input_size % 4 == 0"
    C1 = p["conv1_w"].shape[0]
    C2 = p["conv2_w"].shape[0]
    H = p["fc1_w"].shape[0]
    Lq = L // 4
    S0 = L + 4
    S1 = S0 // 2
    W0 = B * S0
    Wy2 = B * S1 - 2

    # Fold the BatchNorm (running stats) scale into the conv weights; keep the shift.
    sc1, sh1 = _fold_bn(p["bn1_gamma"], p["bn1_beta"], p["bn1_mean"], p["bn1_var"], p["conv1_b"])
    sc2, sh2 = _fold_bn(p["bn2_gamma"], p["bn2_beta"], p["bn2_mean"], p["bn2_var"], p["conv2_b"])
    w1f = p["conv1_w"] * sc1[:, None, None]            # (C1, Cin, 3)
    w2f = p["conv2_w"] * sc2[:, None, None]            # (C2, C1, 3)

    # im2col weight layout: row index = k*Cin_layer + c (matches in-kernel concat order).
    w1t = jnp.transpose(w1f, (2, 1, 0)).reshape(3 * Cin, C1)
    w2t = jnp.transpose(w2f, (2, 1, 0)).reshape(3 * C1, C2)
    t1r = sh1.reshape(1, C1)
    t2r = sh2.reshape(1, C2)

    # fc1: permute columns so column (q*C2 + c) multiplies feature (c*Lq + q),
    # i.e. PyTorch's channel-major x.view(B, -1) flatten.
    wf1t = jnp.transpose(p["fc1_w"].reshape(H, C2, Lq), (2, 1, 0)).reshape(Lq * C2, H)
    bf1r = p["fc1_b"].reshape(1, H)
    wf2r = p["fc2_w"].reshape(1, H)
    b2s = p["fc2_b"].reshape(1, 1)

    xk = jnp.transpose(x, (0, 2, 1))                   # (B, L, Cin): length on sublanes

    n_rows_s2 = ((Wy2 + 2 * S1 + 7) // 8) * 8          # head-room for strided pool-2 reads

    return pl.pallas_call(
        _fused_forward_kernel,
        out_shape=jax.ShapeDtypeStruct((B, 1), jnp.float32),
        in_specs=[pl.BlockSpec(memory_space=pltpu.MemorySpace.VMEM) for _ in range(8)]
        + [pl.BlockSpec(memory_space=pltpu.MemorySpace.SMEM)],
        out_specs=pl.BlockSpec(memory_space=pltpu.MemorySpace.VMEM),
        scratch_shapes=[
            pltpu.VMEM((W0, Cin), jnp.float32),        # staged padded conv1 input
            pltpu.VMEM((W0, C1), jnp.float32),         # conv1 output (+ row head-room)
            pltpu.VMEM((B * S1, C1), jnp.float32),     # staged padded conv2 input
            pltpu.VMEM((n_rows_s2, C2), jnp.float32),  # conv2 output (+ row head-room)
        ],
    )(xk, w1t, t1r, w2t, t2r, wf1t, bf1r, wf2r, b2s)


# ----------------------------------------------------------------------------
# Deterministic synthetic parameters (mirrors the PyTorch module's shapes)
# ----------------------------------------------------------------------------
def init_params(key, input_size):
    ks = jax.random.split(key, 16)
    f = input_size // 4
    return {
        "conv1_w": 0.3 * jax.random.normal(ks[0], (16, 1, 3), jnp.float32),
        "conv1_b": 0.1 * jax.random.normal(ks[1], (16,), jnp.float32),
        "bn1_gamma": 1.0 + 0.1 * jax.random.normal(ks[2], (16,), jnp.float32),
        "bn1_beta": 0.1 * jax.random.normal(ks[3], (16,), jnp.float32),
        "bn1_mean": 0.1 * jax.random.normal(ks[4], (16,), jnp.float32),
        "bn1_var": 1.0 + 0.1 * jnp.abs(jax.random.normal(ks[5], (16,), jnp.float32)),
        "conv2_w": 0.1 * jax.random.normal(ks[6], (32, 16, 3), jnp.float32),
        "conv2_b": 0.1 * jax.random.normal(ks[7], (32,), jnp.float32),
        "bn2_gamma": 1.0 + 0.1 * jax.random.normal(ks[8], (32,), jnp.float32),
        "bn2_beta": 0.1 * jax.random.normal(ks[9], (32,), jnp.float32),
        "bn2_mean": 0.1 * jax.random.normal(ks[10], (32,), jnp.float32),
        "bn2_var": 1.0 + 0.1 * jnp.abs(jax.random.normal(ks[11], (32,), jnp.float32)),
        "fc1_w": 0.05 * jax.random.normal(ks[12], (64, 32 * f), jnp.float32),  # (out, in)
        "fc1_b": 0.1 * jax.random.normal(ks[13], (64,), jnp.float32),
        "fc2_w": 0.05 * jax.random.normal(ks[14], (1, 64), jnp.float32),       # (out, in)
        "fc2_b": 0.1 * jax.random.normal(ks[15], (1,), jnp.float32),
    }


# ----------------------------------------------------------------------------
# Pure-JAX reference (correctness sanity check)
# ----------------------------------------------------------------------------
def reference_forward(x, p):
    def conv1d_same(x, w, b):
        xpad = jnp.pad(x, ((0, 0), (0, 0), (1, 1)))
        L = x.shape[-1]
        out = b[None, :, None]
        for k in range(3):
            out = out + jnp.einsum("oi,bil->bol", w[:, :, k], xpad[:, :, k:k + L])
        return out

    def bn(x, g, bt, m, v):
        return (x - m[None, :, None]) / jnp.sqrt(v[None, :, None] + BN_EPS) \
               * g[None, :, None] + bt[None, :, None]

    def pool(x):
        B, C, L = x.shape
        return x.reshape(B, C, L // 2, 2).max(-1)

    h = pool(jnp.maximum(bn(conv1d_same(x, p["conv1_w"], p["conv1_b"]),
                            p["bn1_gamma"], p["bn1_beta"], p["bn1_mean"], p["bn1_var"]), 0.0))
    h = pool(jnp.maximum(bn(conv1d_same(h, p["conv2_w"], p["conv2_b"]),
                            p["bn2_gamma"], p["bn2_beta"], p["bn2_mean"], p["bn2_var"]), 0.0))
    h = h.reshape(x.shape[0], -1)
    h = jnp.maximum(h @ p["fc1_w"].T + p["fc1_b"], 0.0)
    return h @ p["fc2_w"].T + p["fc2_b"]


if __name__ == "__main__":
    B, input_size = 2, 16                      # x: (batch=2, channels=1, length=16)
    key = jax.random.PRNGKey(0)
    kx, kp = jax.random.split(key)
    x = jax.random.normal(kx, (B, 1, input_size), jnp.float32)
    params = init_params(kp, input_size)

    out = jax.jit(cnn_regressor_forward)(x, params)
    out = jax.block_until_ready(out)
    assert out.shape == (B, 1)

    # Tolerance accounts for TPU default-precision matmuls in either the kernel
    # or the XLA reference; structural bugs would be orders of magnitude larger.
    ref = reference_forward(x, params)
    assert jnp.allclose(out, ref, rtol=2e-2, atol=2e-2), (out, ref)

    print("KERNEL_OK")
</pallas_src>

<mosaic_0001>
module attributes {stable_mosaic.version = 11 : i64} {
  func.func @_fused_forward_kernel(%arg0: memref<2x16x1xf32, #tpu.memory_space<vmem>>, %arg1: memref<3x16xf32, #tpu.memory_space<vmem>>, %arg2: memref<1x16xf32, #tpu.memory_space<vmem>>, %arg3: memref<48x32xf32, #tpu.memory_space<vmem>>, %arg4: memref<1x32xf32, #tpu.memory_space<vmem>>, %arg5: memref<128x64xf32, #tpu.memory_space<vmem>>, %arg6: memref<1x64xf32, #tpu.memory_space<vmem>>, %arg7: memref<1x64xf32, #tpu.memory_space<vmem>>, %arg8: memref<1x1xf32, #tpu.memory_space<smem>>, %arg9: memref<2x1xf32, #tpu.memory_space<vmem>>, %arg10: memref<40x1xf32, #tpu.memory_space<vmem>>, %arg11: memref<40x16xf32, #tpu.memory_space<vmem>>, %arg12: memref<20x16xf32, #tpu.memory_space<vmem>>, %arg13: memref<40x32xf32, #tpu.memory_space<vmem>>) attributes {dimension_semantics = [], scalar_prefetch = 0 : i64, scratch_operands = 4 : i64, tpu.core_type = #tpu.core_type<tc>} {
    %cst = arith.constant 0.000000e+00 : f32
    %0 = vector.broadcast %cst : f32 to vector<40x1xf32>
    %c0 = arith.constant 0 : index
    %c0_0 = arith.constant 0 : index
    %1 = vector.load %arg10[%c0, %c0_0] : memref<40x1xf32, #tpu.memory_space<vmem>>, vector<40x1xf32>
    tpu.vector_store %arg10[%c0, %c0_0], %0 {strides = array<i32>} : memref<40x1xf32, #tpu.memory_space<vmem>>, vector<40x1xf32>,
    %c0_1 = arith.constant 0 : index
    %c0_2 = arith.constant 0 : index
    %c0_3 = arith.constant 0 : index
    %2 = vector.load %arg0[%c0_1, %c0_2, %c0_3] : memref<2x16x1xf32, #tpu.memory_space<vmem>>, vector<1x16x1xf32>
    %3 = vector.shape_cast %2 : vector<1x16x1xf32> to vector<16x1xf32>
    %c1 = arith.constant 1 : index
    %c0_4 = arith.constant 0 : index
    %4 = vector.load %arg10[%c1, %c0_4] : memref<40x1xf32, #tpu.memory_space<vmem>>, vector<16x1xf32>
    tpu.vector_store %arg10[%c1, %c0_4], %3 {strides = array<i32>} : memref<40x1xf32, #tpu.memory_space<vmem>>, vector<16x1xf32>,
    %c1_5 = arith.constant 1 : index
    %c0_6 = arith.constant 0 : index
    %c0_7 = arith.constant 0 : index
    %5 = vector.load %arg0[%c1_5, %c0_6, %c0_7] : memref<2x16x1xf32, #tpu.memory_space<vmem>>, vector<1x16x1xf32>
    %6 = vector.shape_cast %5 : vector<1x16x1xf32> to vector<16x1xf32>
    %c21 = arith.constant 21 : index
    %c0_8 = arith.constant 0 : index
    %7 = vector.load %arg10[%c21, %c0_8] : memref<40x1xf32, #tpu.memory_space<vmem>>, vector<16x1xf32>
    tpu.vector_store %arg10[%c21, %c0_8], %6 {strides = array<i32>} : memref<40x1xf32, #tpu.memory_space<vmem>>, vector<16x1xf32>,
    %c0_9 = arith.constant 0 : index
    %c0_10 = arith.constant 0 : index
    %8 = vector.load %arg10[%c0_9, %c0_10] : memref<40x1xf32, #tpu.memory_space<vmem>>, vector<38x1xf32>
    %c1_11 = arith.constant 1 : index
    %c0_12 = arith.constant 0 : index
    %9 = vector.load %arg10[%c1_11, %c0_12] : memref<40x1xf32, #tpu.memory_space<vmem>>, vector<38x1xf32>
    %c2 = arith.constant 2 : index
    %c0_13 = arith.constant 0 : index
    %10 = vector.load %arg10[%c2, %c0_13] : memref<40x1xf32, #tpu.memory_space<vmem>>, vector<38x1xf32>
    %11 = tpu.concatenate %8, %9, %10 in 1 : vector<38x1xf32>, vector<38x1xf32>, vector<38x1xf32> -> vector<38x3xf32>
    %c0_14 = arith.constant 0 : index
    %c0_15 = arith.constant 0 : index
    %12 = vector.load %arg1[%c0_14, %c0_15] : memref<3x16xf32, #tpu.memory_space<vmem>>, vector<3x16xf32>
    %cst_16 = arith.constant dense<0.000000e+00> : vector<38x16xf32>
    %13 = tpu.matmul %11, %12, %cst_16 {dimension_numbers = #tpu.dot_dimension_numbers<[1], [0], [0], [1], [0, 0, 1, 1], [], []>} : vector<38x3xf32>, vector<3x16xf32>, vector<38x16xf32> -> vector<38x16xf32>
    %c0_17 = arith.constant 0 : index
    %c0_18 = arith.constant 0 : index
    %14 = vector.load %arg2[%c0_17, %c0_18] : memref<1x16xf32, #tpu.memory_space<vmem>>, vector<1x16xf32>
    %15 = vector.broadcast %14 : vector<1x16xf32> to vector<38x16xf32>
    %16 = arith.addf %13, %15 : vector<38x16xf32>
    %cst_19 = arith.constant 0.000000e+00 : f32
    %17 = vector.broadcast %cst_19 : f32 to vector<38x16xf32>
    %18 = arith.maximumf %16, %17 : vector<38x16xf32>
    %c0_20 = arith.constant 0 : index
    %c0_21 = arith.constant 0 : index
    %19 = vector.load %arg11[%c0_20, %c0_21] : memref<40x16xf32, #tpu.memory_space<vmem>>, vector<38x16xf32>
    tpu.vector_store %arg11[%c0_20, %c0_21], %18 {strides = array<i32>} : memref<40x16xf32, #tpu.memory_space<vmem>>, vector<38x16xf32>,
    %c0_22 = arith.constant 0 : index
    %c0_23 = arith.constant 0 : index
    %20 = tpu.strided_load %arg11[%c0_22, %c0_23] {strides = array<i32: 2, 1>} : memref<40x16xf32, #tpu.memory_space<vmem>>, vector<19x16xf32>
    %c1_24 = arith.constant 1 : index
    %c0_25 = arith.constant 0 : index
    %21 = tpu.strided_load %arg11[%c1_24, %c0_25] {strides = array<i32: 2, 1>} : memref<40x16xf32, #tpu.memory_space<vmem>>, vector<19x16xf32>
    %22 = arith.maximumf %20, %21 : vector<19x16xf32>
    %cst_26 = arith.constant 0.000000e+00 : f32
    %23 = vector.broadcast %cst_26 : f32 to vector<20x16xf32>
    %c0_27 = arith.constant 0 : index
    %c0_28 = arith.constant 0 : index
    %24 = vector.load %arg12[%c0_27, %c0_28] : memref<20x16xf32, #tpu.memory_space<vmem>>, vector<20x16xf32>
    tpu.vector_store %arg12[%c0_27, %c0_28], %23 {strides = array<i32>} : memref<20x16xf32, #tpu.memory_space<vmem>>, vector<20x16xf32>,
    %25 = vector.extract_strided_slice %22 {offsets = [0, 0], sizes = [8, 16], strides = [1, 1]} : vector<19x16xf32> to vector<8x16xf32>
    %c1_29 = arith.constant 1 : index
    %c0_30 = arith.constant 0 : index
    %26 = vector.load %arg12[%c1_29, %c0_30] : memref<20x16xf32, #tpu.memory_space<vmem>>, vector<8x16xf32>
    tpu.vector_store %arg12[%c1_29, %c0_30], %25 {strides = array<i32>} : memref<20x16xf32, #tpu.memory_space<vmem>>, vector<8x16xf32>,
    %27 = vector.extract_strided_slice %22 {offsets = [10, 0], sizes = [8, 16], strides = [1, 1]} : vector<19x16xf32> to vector<8x16xf32>
    %c11 = arith.constant 11 : index
    %c0_31 = arith.constant 0 : index
    %28 = vector.load %arg12[%c11, %c0_31] : memref<20x16xf32, #tpu.memory_space<vmem>>, vector<8x16xf32>
    tpu.vector_store %arg12[%c11, %c0_31], %27 {strides = array<i32>} : memref<20x16xf32, #tpu.memory_space<vmem>>, vector<8x16xf32>,
    %c0_32 = arith.constant 0 : index
    %c0_33 = arith.constant 0 : index
    %29 = vector.load %arg12[%c0_32, %c0_33] : memref<20x16xf32, #tpu.memory_space<vmem>>, vector<18x16xf32>
    %c1_34 = arith.constant 1 : index
    %c0_35 = arith.constant 0 : index
    %30 = vector.load %arg12[%c1_34, %c0_35] : memref<20x16xf32, #tpu.memory_space<vmem>>, vector<18x16xf32>
    %c2_36 = arith.constant 2 : index
    %c0_37 = arith.constant 0 : index
    %31 = vector.load %arg12[%c2_36, %c0_37] : memref<20x16xf32, #tpu.memory_space<vmem>>, vector<18x16xf32>
    %32 = tpu.concatenate %29, %30, %31 in 1 : vector<18x16xf32>, vector<18x16xf32>, vector<18x16xf32> -> vector<18x48xf32>
    %c0_38 = arith.constant 0 : index
    %c0_39 = arith.constant 0 : index
    %33 = vector.load %arg3[%c0_38, %c0_39] : memref<48x32xf32, #tpu.memory_space<vmem>>, vector<48x32xf32>
    %cst_40 = arith.constant dense<0.000000e+00> : vector<18x32xf32>
    %34 = tpu.matmul %32, %33, %cst_40 {dimension_numbers = #tpu.dot_dimension_numbers<[1], [0], [0], [1], [0, 0, 1, 1], [], []>} : vector<18x48xf32>, vector<48x32xf32>, vector<18x32xf32> -> vector<18x32xf32>
    %c0_41 = arith.constant 0 : index
    %c0_42 = arith.constant 0 : index
    %35 = vector.load %arg4[%c0_41, %c0_42] : memref<1x32xf32, #tpu.memory_space<vmem>>, vector<1x32xf32>
    %36 = vector.broadcast %35 : vector<1x32xf32> to vector<18x32xf32>
    %37 = arith.addf %34, %36 : vector<18x32xf32>
    %cst_43 = arith.constant 0.000000e+00 : f32
    %38 = vector.broadcast %cst_43 : f32 to vector<18x32xf32>
    %39 = arith.maximumf %37, %38 : vector<18x32xf32>
    %c0_44 = arith.constant 0 : index
    %c0_45 = arith.constant 0 : index
    %40 = vector.load %arg13[%c0_44, %c0_45] : memref<40x32xf32, #tpu.memory_space<vmem>>, vector<18x32xf32>
    tpu.vector_store %arg13[%c0_44, %c0_45], %39 {strides = array<i32>} : memref<40x32xf32, #tpu.memory_space<vmem>>, vector<18x32xf32>,
    %c0_46 = arith.constant 0 : index
    %c0_47 = arith.constant 0 : index
    %41 = tpu.strided_load %arg13[%c0_46, %c0_47] {strides = array<i32: 10, 1>} : memref<40x32xf32, #tpu.memory_space<vmem>>, vector<2x32xf32>
    %c1_48 = arith.constant 1 : index
    %c0_49 = arith.constant 0 : index
    %42 = tpu.strided_load %arg13[%c1_48, %c0_49] {strides = array<i32: 10, 1>} : memref<40x32xf32, #tpu.memory_space<vmem>>, vector<2x32xf32>
    %43 = arith.maximumf %41, %42 : vector<2x32xf32>
    %c2_50 = arith.constant 2 : index
    %c0_51 = arith.constant 0 : index
    %44 = tpu.strided_load %arg13[%c2_50, %c0_51] {strides = array<i32: 10, 1>} : memref<40x32xf32, #tpu.memory_space<vmem>>, vector<2x32xf32>
    %c3 = arith.constant 3 : index
    %c0_52 = arith.constant 0 : index
    %45 = tpu.strided_load %arg13[%c3, %c0_52] {strides = array<i32: 10, 1>} : memref<40x32xf32, #tpu.memory_space<vmem>>, vector<2x32xf32>
    %46 = arith.maximumf %44, %45 : vector<2x32xf32>
    %c4 = arith.constant 4 : index
    %c0_53 = arith.constant 0 : index
    %47 = tpu.strided_load %arg13[%c4, %c0_53] {strides = array<i32: 10, 1>} : memref<40x32xf32, #tpu.memory_space<vmem>>, vector<2x32xf32>
    %c5 = arith.constant 5 : index
    %c0_54 = arith.constant 0 : index
    %48 = tpu.strided_load %arg13[%c5, %c0_54] {strides = array<i32: 10, 1>} : memref<40x32xf32, #tpu.memory_space<vmem>>, vector<2x32xf32>
    %49 = arith.maximumf %47, %48 : vector<2x32xf32>
    %c6 = arith.constant 6 : index
    %c0_55 = arith.constant 0 : index
    %50 = tpu.strided_load %arg13[%c6, %c0_55] {strides = array<i32: 10, 1>} : memref<40x32xf32, #tpu.memory_space<vmem>>, vector<2x32xf32>
    %c7 = arith.constant 7 : index
    %c0_56 = arith.constant 0 : index
    %51 = tpu.strided_load %arg13[%c7, %c0_56] {strides = array<i32: 10, 1>} : memref<40x32xf32, #tpu.memory_space<vmem>>, vector<2x32xf32>
    %52 = arith.maximumf %50, %51 : vector<2x32xf32>
    %53 = tpu.concatenate %43, %46, %49, %52 in 1 : vector<2x32xf32>, vector<2x32xf32>, vector<2x32xf32>, vector<2x32xf32> -> vector<2x128xf32>
    %c0_57 = arith.constant 0 : index
    %c0_58 = arith.constant 0 : index
    %54 = vector.load %arg5[%c0_57, %c0_58] : memref<128x64xf32, #tpu.memory_space<vmem>>, vector<128x64xf32>
    %cst_59 = arith.constant dense<0.000000e+00> : vector<2x64xf32>
    %55 = tpu.matmul %53, %54, %cst_59 {dimension_numbers = #tpu.dot_dimension_numbers<[1], [0], [0], [1], [0, 0, 1, 1], [], []>} : vector<2x128xf32>, vector<128x64xf32>, vector<2x64xf32> -> vector<2x64xf32>
    %c0_60 = arith.constant 0 : index
    %c0_61 = arith.constant 0 : index
    %56 = vector.load %arg6[%c0_60, %c0_61] : memref<1x64xf32, #tpu.memory_space<vmem>>, vector<1x64xf32>
    %57 = vector.broadcast %56 : vector<1x64xf32> to vector<2x64xf32>
    %58 = arith.addf %55, %57 : vector<2x64xf32>
    %cst_62 = arith.constant 0.000000e+00 : f32
    %59 = vector.broadcast %cst_62 : f32 to vector<2x64xf32>
    %60 = arith.maximumf %58, %59 : vector<2x64xf32>
    %c0_63 = arith.constant 0 : index
    %c0_64 = arith.constant 0 : index
    %61 = vector.load %arg7[%c0_63, %c0_64] : memref<1x64xf32, #tpu.memory_space<vmem>>, vector<1x64xf32>
    %62 = vector.broadcast %61 : vector<1x64xf32> to vector<2x64xf32>
    %63 = arith.mulf %60, %62 : vector<2x64xf32>
    %cst_65 = arith.constant dense<0.000000e+00> : vector<2xf32>
    %64 = vector.multi_reduction <add>, %63, %cst_65 [1] : vector<2x64xf32> to vector<2xf32>
    %65 = vector.shape_cast %64 : vector<2xf32> to vector<2x1xf32>
    %c0_66 = arith.constant 0 : index
    %c0_67 = arith.constant 0 : index
    %66 = memref.load %arg8[%c0_66, %c0_67] : memref<1x1xf32, #tpu.memory_space<smem>>
    %67 = vector.broadcast %66 : f32 to vector<2x1xf32>
    %68 = arith.addf %65, %67 : vector<2x1xf32>
    %c0_68 = arith.constant 0 : index
    %c0_69 = arith.constant 0 : index
    %69 = vector.load %arg9[%c0_68, %c0_69] : memref<2x1xf32, #tpu.memory_space<vmem>>, vector<2x1xf32>
    tpu.vector_store %arg9[%c0_68, %c0_69], %68 {strides = array<i32>} : memref<2x1xf32, #tpu.memory_space<vmem>>, vector<2x1xf32>,
    return
  }
}

</mosaic_0001>

<llo_original>
// kernel: cnn_regressor_forward.1
$region0: #{cnn_regressor_forward.1}
  #allocation0 [shape = 'u32[]', space=smem, size = 0x4, offset = 0x4, fixed_abs, tag = 'smem constant byte address 0x4 - core index']
  #allocation1 [shape = 'u32[144,128]{1,0:T(1,128)}', space=vmem, size = 0x12000, scoped, tag = 'internal scratch']
  #allocation2 [shape = 'f32[40,1]{1,0:T(8,128)}', space=vmem, size = 0x5000, scoped, tag = 'scratch operand']
  #allocation3 [shape = 'f32[40,16]{1,0:T(8,128)}', space=vmem, size = 0x5000, scoped, tag = 'scratch operand']
  #allocation4 [shape = 'f32[20,16]{1,0:T(8,128)}', space=vmem, size = 0x3000, scoped, tag = 'scratch operand']
  #allocation5 [shape = 'f32[40,32]{1,0:T(8,128)}', space=vmem, size = 0x5000, scoped, tag = 'scratch operand']
  #allocation6 [shape = 'f32[1,1]{1,0:T(1,128)S(6)}', space=smem, size = 0x200, scoped, tag = 'scoped memory for cnn_regressor_forward.1']
  %s0 = inlined_call_operand.vmem [shape: f32[2,16,1], index: 0, kind: input, shape index: {}]
  %s1 = inlined_call_operand.vmem [shape: f32[3,16], index: 1, kind: input, shape index: {}]
  %s2 = inlined_call_operand.vmem [shape: f32[1,16], index: 2, kind: input, shape index: {}]
  %s3 = inlined_call_operand.vmem [shape: f32[48,32], index: 3, kind: input, shape index: {}]
  %s4 = inlined_call_operand.vmem [shape: f32[1,32], index: 4, kind: input, shape index: {}]
  %s5 = inlined_call_operand.vmem [shape: f32[128,64], index: 5, kind: input, shape index: {}]
  %s6 = inlined_call_operand.vmem [shape: f32[1,64], index: 6, kind: input, shape index: {}]
  %s7 = inlined_call_operand.vmem [shape: f32[1,64], index: 7, kind: input, shape index: {}]
  %s8 = inlined_call_operand.<no memory space> [shape: f32[1,1], index: 8, kind: input, shape index: {}]
  %s9 = inlined_call_operand.vmem [shape: f32[2,1], index: 9, kind: output, shape index: {}]
  %s10 = sld [smem:[#allocation0]]
  $region46: #{cnn_regressor_forward.1} parent=0
    _
  %s12 = ssub.s32 1, %s10
  %s13 = scalar_select 0, %s12, %s10
  %14 = sst [smem:[#allocation6]] %s8
  // Predicated region
  $region2: #{cnn_regressor_forward.1} parent=0 // pred_check
    _
  $region3: #{cnn_regressor_forward.1} parent=0 // pred_check_branch
    %16 = sbr.rel (0) target = $region5
  $region4: #{cnn_regressor_forward.1} parent=0 // pred_region
    _
  $region5: #{cnn_regressor_forward.1} parent=0 // pred_fallthru
    _
  // Predicated region
  $region6: #{cnn_regressor_forward.1} parent=0 // pred_check
    _
  $region7: #{cnn_regressor_forward.1} parent=0 // pred_check_branch
    %18 = sbr.rel (0) target = $region9
  $region8: #{cnn_regressor_forward.1} parent=0 // pred_region
    _
  $region9: #{cnn_regressor_forward.1} parent=0 // pred_fallthru
    _
  // Predicated region
  $region10: #{cnn_regressor_forward.1} parent=0 // pred_check
    _
  $region11: #{cnn_regressor_forward.1} parent=0 // pred_check_branch
    %20 = sbr.rel (0) target = $region13
  $region12: #{cnn_regressor_forward.1} parent=0 // pred_region
    _
  $region13: #{cnn_regressor_forward.1} parent=0 // pred_fallthru
    _
  // Predicated region
  $region14: #{cnn_regressor_forward.1} parent=0 // pred_check
    _
  $region15: #{cnn_regressor_forward.1} parent=0 // pred_check_branch
    %22 = sbr.rel (0) target = $region17
  $region16: #{cnn_regressor_forward.1} parent=0 // pred_region
    _
  $region17: #{cnn_regressor_forward.1} parent=0 // pred_fallthru
    _
  // Predicated region
  $region18: #{cnn_regressor_forward.1} parent=0 // pred_check
    _
  $region19: #{cnn_regressor_forward.1} parent=0 // pred_check_branch
    %24 = sbr.rel (0) target = $region21
  $region20: #{cnn_regressor_forward.1} parent=0 // pred_region
    _
  $region21: #{cnn_regressor_forward.1} parent=0 // pred_fallthru
    _
  // Predicated region
  $region22: #{cnn_regressor_forward.1} parent=0 // pred_check
    _
  $region23: #{cnn_regressor_forward.1} parent=0 // pred_check_branch
    %26 = sbr.rel (0) target = $region25
  $region24: #{cnn_regressor_forward.1} parent=0 // pred_region
    _
  $region25: #{cnn_regressor_forward.1} parent=0 // pred_fallthru
    _
  // Predicated region
  $region26: #{cnn_regressor_forward.1} parent=0 // pred_check
    _
  $region27: #{cnn_regressor_forward.1} parent=0 // pred_check_branch
    %28 = sbr.rel (0) target = $region29
  $region28: #{cnn_regressor_forward.1} parent=0 // pred_region
    _
  $region29: #{cnn_regressor_forward.1} parent=0 // pred_fallthru
    _
  // Predicated region
  $region30: #{cnn_regressor_forward.1} parent=0 // pred_check
    _
  $region31: #{cnn_regressor_forward.1} parent=0 // pred_check_branch
    %30 = sbr.rel (0) target = $region33
  $region32: #{cnn_regressor_forward.1} parent=0 // pred_region
    _
  $region33: #{cnn_regressor_forward.1} parent=0 // pred_fallthru
    _
  // Predicated region
  $region34: #{cnn_regressor_forward.1} parent=0 // pred_check
    _
  $region35: #{cnn_regressor_forward.1} parent=0 // pred_check_branch
    %32 = sbr.rel (0) target = $region37
  $region36: #{cnn_regressor_forward.1} parent=0 // pred_region
    _
  $region37: #{cnn_regressor_forward.1} parent=0 // pred_fallthru
    _
  %vm33 = vcmask 7168
  %34 = vst.msk [vmem:[#allocation2] sm:$0xff] %vm33, 0.0
  %35 = vst.msk [vmem:[#allocation2 + $0x8] sm:$0xff] %vm33, 0.0
  %36 = vst.msk [vmem:[#allocation2 + $0x10] sm:$0xff] %vm33, 0.0
  %37 = vst.msk [vmem:[#allocation2 + $0x18] sm:$0xff] %vm33, 0.0
  %38 = vst.msk [vmem:[#allocation2 + $0x20] sm:$0xff] %vm33, 0.0
  %v39 = vld [vmem:[%s0] sm:$0xff]
  %v40 = vld [vmem:[%s0 + $0x8] sm:$0xff]
  %41 = vst.msk [vmem:[#allocation2 + $0x1] sm:$0xff] %vm33, %v39
  %42 = vst.msk [vmem:[#allocation2 + $0x9] sm:$0xff] %vm33, %v40
  %s43 = scalar_lea.vmem %s0, 16
  %v44 = vld [vmem:[%s43] sm:$0xff]
  %v45 = vld [vmem:[%s43 + $0x8] sm:$0xff]
  %46 = vst.msk [vmem:[#allocation2 + $0x15] sm:$0xff] %vm33, %v44
  %47 = vst.msk [vmem:[#allocation2 + $0x1d] sm:$0xff] %vm33, %v45
  %v48 = vld [vmem:[#allocation2] sm:$0xff]
  %v49 = vld [vmem:[#allocation2 + $0x8] sm:$0xff]
  %v50 = vld [vmem:[#allocation2 + $0x10] sm:$0xff]
  %v51 = vld [vmem:[#allocation2 + $0x18] sm:$0xff]
  %v52 = vld [vmem:[#allocation2 + $0x20] sm:$0x3f]
  %v53 = vld [vmem:[#allocation2 + $0x1] sm:$0xff]
  %v54 = vld [vmem:[#allocation2 + $0x9] sm:$0xff]
  %v55 = vld [vmem:[#allocation2 + $0x11] sm:$0xff]
  %v56 = vld [vmem:[#allocation2 + $0x19] sm:$0xff]
  %v57 = vld [vmem:[#allocation2 + $0x21] sm:$0x3f]
  %v58 = vld [vmem:[#allocation2 + $0x2] sm:$0xff]
  %v59 = vld [vmem:[#allocation2 + $0xa] sm:$0xff]
  %v60 = vld [vmem:[#allocation2 + $0x12] sm:$0xff]
  %v61 = vld [vmem:[#allocation2 + $0x1a] sm:$0xff]
  %v62 = vld [vmem:[#allocation2 + $0x22] sm:$0x3f]
  %68 = vrot.lane.b32.xlu0 %v53, 1
  %v69 = vpop.permute.xlu0 %68
  %70 = vrot.lane.b32.xlu0 %v54, 1
  %v71 = vpop.permute.xlu0 %70
  %72 = vrot.lane.b32.xlu0 %v55, 1
  %v73 = vpop.permute.xlu0 %72
  %74 = vrot.lane.b32.xlu0 %v56, 1
  %v75 = vpop.permute.xlu0 %74
  %76 = vrot.lane.b32.xlu0 %v57, 1
  %v77 = vpop.permute.xlu0 %76
  %88 = vrot.lane.b32.xlu0 %v58, 2
  %v89 = vpop.permute.xlu0 %88
  %90 = vrot.lane.b32.xlu0 %v59, 2
  %v91 = vpop.permute.xlu0 %90
  %92 = vrot.lane.b32.xlu0 %v60, 2
  %v93 = vpop.permute.xlu0 %92
  %94 = vrot.lane.b32.xlu0 %v61, 2
  %v95 = vpop.permute.xlu0 %94
  %96 = vrot.lane.b32.xlu0 %v62, 2
  %v97 = vpop.permute.xlu0 %96
  %v103 = vsel %vm33, %v48, %v69
  %v104 = vsel %vm33, %v49, %v71
  %v105 = vsel %vm33, %v50, %v73
  %v106 = vsel %vm33, %v51, %v75
  %v107 = vsel %vm33, %v52, %v77
  %vm108 = vcmask 15360
  %v109 = vsel %vm108, %v103, %v89
  %v110 = vsel %vm108, %v104, %v91
  %v111 = vsel %vm108, %v105, %v93
  %v112 = vsel %vm108, %v106, %v95
  %v113 = vsel %vm108, %v107, %v97
  %v114 = vld [vmem:[%s1] sm:$0x7]
  %v115 = vld [vmem:[%s2] sm:$0x1]
  %v117 = vlaneseq
  %v118 = vshrl.u32 %v117, 7
  %v119 = vsub.s32 0, %v118
  %v120 = vrot.slane %v115, %v119
  %vm122 = vcmask 23552
  %v124 = vsel %vm122, %v109, 0
  %v127 = vsel %vm122, %v110, 0
  %v130 = vsel %vm122, %v111, 0
  %v133 = vsel %vm122, %v112, 0
  %v136 = vsel %vm122, %v113, 0
  %vm138 = vcmask 1042432
  %v140 = vsel %vm138, %v114, 0
  %142 = vmatprep.subr.mxu0 0.0
  %143 = vmatpush1.msra.mxu0 %v140
  %144 = vmatprep.subr.mxu0 0.0
  %145 = vmatpush1.msra.mxu0 0.0
  %146 = vmatprep.subr.mxu0 0.0
  %147 = vmatpush1.msra.mxu0 0.0
  %148 = vmatprep.subr.mxu0 0.0
  %149 = vmatpush1.msra.mxu0 0.0
  %150 = vmatprep.subr.mxu0 0.0
  %151 = vmatpush1.msra.mxu0 0.0
  %152 = vmatprep.subr.mxu0 0.0
  %153 = vmatpush1.msra.mxu0 0.0
  %154 = vmatprep.subr.mxu0 0.0
  %155 = vmatpush1.msra.mxu0 0.0
  %156 = vmatprep.subr.mxu0 0.0
  %157 = vmatpush1.msra.mxu0 0.0
  %158 = vmatprep.subr.mxu0 0.0
  %159 = vmatpush1.msra.mxu0 0.0
  %160 = vmatprep.subr.mxu0 0.0
  %161 = vmatpush1.msra.mxu0 0.0
  %162 = vmatprep.subr.mxu0 0.0
  %163 = vmatpush1.msra.mxu0 0.0
  %164 = vmatprep.subr.mxu0 0.0
  %165 = vmatpush1.msra.mxu0 0.0
  %166 = vmatprep.subr.mxu0 0.0
  %167 = vmatpush1.msra.mxu0 0.0
  %168 = vmatprep.subr.mxu0 0.0
  %169 = vmatpush1.msra.mxu0 0.0
  %170 = vmatprep.subr.mxu0 0.0
  %171 = vmatpush1.msra.mxu0 0.0
  %172 = vmatprep.subr.mxu0 0.0
  %173 = vmatpush1.msra.mxu0 0.0
  %174 = vmatprep.subr.mxu0 0.0
  %175 = vmatpush1.msra.mxu0 0.0
  %176 = vmatprep.subr.mxu0 0.0
  %177 = vmatpush1.msra.mxu0 0.0
  %178 = vmatprep.subr.mxu0 0.0
  %179 = vmatpush1.msra.mxu0 0.0
  %180 = vmatprep.subr.mxu0 0.0
  %181 = vmatpush1.msra.mxu0 0.0
  %182 = vmatprep.subr.mxu0 0.0
  %183 = vmatpush1.msra.mxu0 0.0
  %184 = vmatprep.subr.mxu0 0.0
  %185 = vmatpush1.msra.mxu0 0.0
  %186 = vmatprep.subr.mxu0 0.0
  %187 = vmatpush1.msra.mxu0 0.0
  %188 = vmatprep.subr.mxu0 0.0
  %189 = vmatpush1.msra.mxu0 0.0
  %190 = vmatprep.subr.mxu0 0.0
  %191 = vmatpush1.msra.mxu0 0.0
  %192 = vmatprep.subr.mxu0 0.0
  %193 = vmatpush1.msra.mxu0 0.0
  %194 = vmatprep.subr.mxu0 0.0
  %195 = vmatpush1.msra.mxu0 0.0
  %196 = vmatprep.subr.mxu0 0.0
  %197 = vmatpush1.msra.mxu0 0.0
  %198 = vmatprep.subr.mxu0 0.0
  %199 = vmatpush1.msra.mxu0 0.0
  %200 = vmatprep.subr.mxu0 0.0
  %201 = vmatpush1.msra.mxu0 0.0
  %202 = vmatprep.subr.mxu0 0.0
  %203 = vmatpush1.msra.mxu0 0.0
  %204 = vmatprep.subr.mxu0 0.0
  %205 = vmatpush1.msra.mxu0 0.0
  %206 = vmatprep.mubr.f32.mxu0 0.0
  %207 = vmatmul.mubr.f32.gmra.mrb[0].mxu0 %v124
  %v208 = vpop.f32.mrb[0].mxu0
  %v209 = vadd.f32 %v120, %v208
  %v210 = vpop.f32.mrb[0].mxu0
  %211 = vmatprep.mubr.f32.mxu0 0.0
  %212 = vmatmul.mubr.f32.gmra.mrb[0].mxu0 %v127
  %v213 = vpop.f32.mrb[0].mxu0
  %v214 = vadd.f32 %v120, %v213
  %v215 = vpop.f32.mrb[0].mxu0
  %216 = vmatprep.mubr.f32.mxu0 0.0
  %217 = vmatmul.mubr.f32.gmra.mrb[0].mxu0 %v130
  %v218 = vpop.f32.mrb[0].mxu0
  %v219 = vadd.f32 %v120, %v218
  %v220 = vpop.f32.mrb[0].mxu0
  %221 = vmatprep.mubr.f32.mxu0 0.0
  %222 = vmatmul.mubr.f32.gmra.mrb[0].mxu0 %v133
  %v223 = vpop.f32.mrb[0].mxu0
  %v224 = vadd.f32 %v120, %v223
  %v225 = vpop.f32.mrb[0].mxu0
  %226 = vmatprep.mubr.f32.mxu0 0.0
  %227 = vmatmul.mubr.f32.gmra.mrb[0].mxu0 %v136
  %v228 = vpop.f32.mrb[0].mxu0
  %v229 = vadd.f32 %v120, %v228
  %v230 = vpop.f32.mrb[0].mxu0
  %231 = vdwg.mxu0
  %v232 = vmax.f32 %v209, 0.0
  %v233 = vmax.f32 %v214, 0.0
  %v234 = vmax.f32 %v219, 0.0
  %v235 = vmax.f32 %v224, 0.0
  %v236 = vmax.f32 %v229, 0.0
  %vm237 = vcmask 130048
  %238 = vst.msk [vmem:[#allocation3] sm:$0xff] %vm237, %v232
  %239 = vst.msk [vmem:[#allocation3 + $0x8] sm:$0xff] %vm237, %v233
  %240 = vst.msk [vmem:[#allocation3 + $0x10] sm:$0xff] %vm237, %v234
  %241 = vst.msk [vmem:[#allocation3 + $0x18] sm:$0xff] %vm237, %v235
  %vm242 = vcmask 128000
  %243 = vst.msk [vmem:[#allocation3 + $0x20] sm:$0x3f] %vm242, %v236
  %v244 = vld [vmem:[#allocation3] ss:$2 sm:$0xff]
  %s245 = scalar_lea.vmem [#allocation3], 16
  %v246 = vld [vmem:[%s245] ss:$2 sm:$0xff]
  %s247 = scalar_lea.vmem [#allocation3], 32
  %v248 = vld [vmem:[%s247] ss:$2 sm:$0x7]
  %s249 = scalar_lea.vmem [#allocation3], 1
  %v250 = vld [vmem:[%s249] ss:$2 sm:$0xff]
  %s251 = scalar_lea.vmem [#allocation3], 17
  %v252 = vld [vmem:[%s251] ss:$2 sm:$0xff]
  %s253 = scalar_lea.vmem [#allocation3], 33
  %v254 = vld [vmem:[%s253] ss:$2 sm:$0x7]
  %v255 = vmax.f32 %v244, %v250
  %v256 = vmax.f32 %v246, %v252
  %v257 = vmax.f32 %v248, %v254
  %258 = vst.msk [vmem:[#allocation4] sm:$0xff] %vm237, 0.0
  %259 = vst.msk [vmem:[#allocation4 + $0x8] sm:$0xff] %vm237, 0.0
  %vm260 = vcmask 125952
  %261 = vst.msk [vmem:[#allocation4 + $0x10] sm:$0xf] %vm260, 0.0
  %262 = vst.msk [vmem:[#allocation4 + $0x1] sm:$0xff] %vm237, %v255
  %vm263 = vcmask 130050
  %264 = vst.msk [vmem:[#allocation4 + $0x9] sm:$0xfc] %vm263, %v256
  %vm265 = vcmask 123904
  %266 = vst.msk [vmem:[#allocation4 + $0x11] sm:$0x3] %vm265, %v257
  %v267 = vld [vmem:[#allocation4] sm:$0xff]
  %v268 = vld [vmem:[#allocation4 + $0x8] sm:$0xff]
  %v269 = vld [vmem:[#allocation4 + $0x10] sm:$0x3]
  %v270 = vld [vmem:[#allocation4 + $0x1] sm:$0xff]
  %v271 = vld [vmem:[#allocation4 + $0x9] sm:$0xff]
  %v272 = vld [vmem:[#allocation4 + $0x11] sm:$0x3]
  %v273 = vld [vmem:[#allocation4 + $0x2] sm:$0xff]
  %v274 = vld [vmem:[#allocation4 + $0xa] sm:$0xff]
  %v275 = vld [vmem:[#allocation4 + $0x12] sm:$0x3]
  %279 = vrot.lane.b32.xlu0 %v270, 16
  %v280 = vpop.permute.xlu0 %279
  %281 = vrot.lane.b32.xlu0 %v271, 16
  %v282 = vpop.permute.xlu0 %281
  %283 = vrot.lane.b32.xlu0 %v272, 16
  %v284 = vpop.permute.xlu0 %283
  %291 = vrot.lane.b32.xlu0 %v273, 32
  %v292 = vpop.permute.xlu0 %291
  %293 = vrot.lane.b32.xlu0 %v274, 32
  %v294 = vpop.permute.xlu0 %293
  %295 = vrot.lane.b32.xlu0 %v275, 32
  %v296 = vpop.permute.xlu0 %295
  %v300 = vsel %vm237, %v267, %v280
  %v301 = vsel %vm237, %v268, %v282
  %v302 = vsel %vm237, %v269, %v284
  %vm303 = vcmask 261120
  %v304 = vsel %vm303, %v300, %v292
  %v305 = vsel %vm303, %v301, %v294
  %v306 = vsel %vm303, %v302, %v296
  %v307 = vld [vmem:[%s3] sm:$0xff]
  %v308 = vld [vmem:[%s3 + $0x8] sm:$0xff]
  %v309 = vld [vmem:[%s3 + $0x10] sm:$0xff]
  %v310 = vld [vmem:[%s3 + $0x18] sm:$0xff]
  %v311 = vld [vmem:[%s3 + $0x20] sm:$0xff]
  %v312 = vld [vmem:[%s3 + $0x28] sm:$0xff]
  %v313 = vld [vmem:[%s4] sm:$0x1]
  %v315 = vlaneseq
  %v316 = vshrl.u32 %v315, 7
  %v317 = vsub.s32 0, %v316
  %v318 = vrot.slane %v313, %v317
  %vm320 = vcmask 392192
  %v322 = vsel %vm320, %v304, 0
  %v325 = vsel %vm320, %v305, 0
  %v328 = vsel %vm320, %v306, 0
  %330 = vmatprep.subr.mxu0 0.0
  %331 = vmatpush1.msra.mxu0 %v307
  %332 = vmatprep.subr.mxu0 0.0
  %333 = vmatpush1.msra.mxu0 %v308
  %334 = vmatprep.subr.mxu0 0.0
  %335 = vmatpush1.msra.mxu0 %v309
  %336 = vmatprep.subr.mxu0 0.0
  %337 = vmatpush1.msra.mxu0 %v310
  %338 = vmatprep.subr.mxu0 0.0
  %339 = vmatpush1.msra.mxu0 %v311
  %340 = vmatprep.subr.mxu0 0.0
  %341 = vmatpush1.msra.mxu0 %v312
  %342 = vmatprep.subr.mxu0 0.0
  %343 = vmatpush1.msra.mxu0 0.0
  %344 = vmatprep.subr.mxu0 0.0
  %345 = vmatpush1.msra.mxu0 0.0
  %346 = vmatprep.subr.mxu0 0.0
  %347 = vmatpush1.msra.mxu0 0.0
  %348 = vmatprep.subr.mxu0 0.0
  %349 = vmatpush1.msra.mxu0 0.0
  %350 = vmatprep.subr.mxu0 0.0
  %351 = vmatpush1.msra.mxu0 0.0
  %352 = vmatprep.subr.mxu0 0.0
  %353 = vmatpush1.msra.mxu0 0.0
  %354 = vmatprep.subr.mxu0 0.0
  %355 = vmatpush1.msra.mxu0 0.0
  %356 = vmatprep.subr.mxu0 0.0
  %357 = vmatpush1.msra.mxu0 0.0
  %358 = vmatprep.subr.mxu0 0.0
  %359 = vmatpush1.msra.mxu0 0.0
  %360 = vmatprep.subr.mxu0 0.0
  %361 = vmatpush1.msra.mxu0 0.0
  %362 = vmatprep.subr.mxu0 0.0
  %363 = vmatpush1.msra.mxu0 0.0
  %364 = vmatprep.subr.mxu0 0.0
  %365 = vmatpush1.msra.mxu0 0.0
  %366 = vmatprep.subr.mxu0 0.0
  %367 = vmatpush1.msra.mxu0 0.0
  %368 = vmatprep.subr.mxu0 0.0
  %369 = vmatpush1.msra.mxu0 0.0
  %370 = vmatprep.subr.mxu0 0.0
  %371 = vmatpush1.msra.mxu0 0.0
  %372 = vmatprep.subr.mxu0 0.0
  %373 = vmatpush1.msra.mxu0 0.0
  %374 = vmatprep.subr.mxu0 0.0
  %375 = vmatpush1.msra.mxu0 0.0
  %376 = vmatprep.subr.mxu0 0.0
  %377 = vmatpush1.msra.mxu0 0.0
  %378 = vmatprep.subr.mxu0 0.0
  %379 = vmatpush1.msra.mxu0 0.0
  %380 = vmatprep.subr.mxu0 0.0
  %381 = vmatpush1.msra.mxu0 0.0
  %382 = vmatprep.subr.mxu0 0.0
  %383 = vmatpush1.msra.mxu0 0.0
  %384 = vmatprep.subr.mxu0 0.0
  %385 = vmatpush1.msra.mxu0 0.0
  %386 = vmatprep.subr.mxu0 0.0
  %387 = vmatpush1.msra.mxu0 0.0
  %388 = vmatprep.subr.mxu0 0.0
  %389 = vmatpush1.msra.mxu0 0.0
  %390 = vmatprep.subr.mxu0 0.0
  %391 = vmatpush1.msra.mxu0 0.0
  %392 = vmatprep.subr.mxu0 0.0
  %393 = vmatpush1.msra.mxu0 0.0
  %394 = vmatprep.mubr.f32.mxu0 0.0
  %395 = vmatmul.mubr.f32.gmra.mrb[0].mxu0 %v322
  %v396 = vpop.f32.mrb[0].mxu0
  %v397 = vadd.f32 %v318, %v396
  %v398 = vpop.f32.mrb[0].mxu0
  %399 = vmatprep.mubr.f32.mxu0 0.0
  %400 = vmatmul.mubr.f32.gmra.mrb[0].mxu0 %v325
  %v401 = vpop.f32.mrb[0].mxu0
  %v402 = vadd.f32 %v318, %v401
  %v403 = vpop.f32.mrb[0].mxu0
  %404 = vmatprep.mubr.f32.mxu0 0.0
  %405 = vmatmul.mubr.f32.gmra.mrb[0].mxu0 %v328
  %v406 = vpop.f32.mrb[0].mxu0
  %v407 = vadd.f32 %v318, %v406
  %v408 = vpop.f32.mrb[0].mxu0
  %409 = vdwg.mxu0
  %v410 = vmax.f32 %v397, 0.0
  %v411 = vmax.f32 %v402, 0.0
  %v412 = vmax.f32 %v407, 0.0
  %413 = vst.msk [vmem:[#allocation5] sm:$0xff] %vm303, %v410
  %414 = vst.msk [vmem:[#allocation5 + $0x8] sm:$0xff] %vm303, %v411
  %vm415 = vcmask 254976
  %416 = vst.msk [vmem:[#allocation5 + $0x10] sm:$0x3] %vm415, %v412
  %v417 = vld [vmem:[#allocation5] ss:$10 sm:$0x3]
  %s418 = scalar_lea.vmem [#allocation5], 1
  %v419 = vld [vmem:[%s418] ss:$10 sm:$0x3]
  %v420 = vmax.f32 %v417, %v419
  %s421 = scalar_lea.vmem [#allocation5], 2
  %v422 = vld [vmem:[%s421] ss:$10 sm:$0x3]
  %s423 = scalar_lea.vmem [#allocation5], 3
  %v424 = vld [vmem:[%s423] ss:$10 sm:$0x3]
  %v425 = vmax.f32 %v422, %v424
  %s426 = scalar_lea.vmem [#allocation5], 4
  %v427 = vld [vmem:[%s426] ss:$10 sm:$0x3]
  %s428 = scalar_lea.vmem [#allocation5], 5
  %v429 = vld [vmem:[%s428] ss:$10 sm:$0x3]
  %v430 = vmax.f32 %v427, %v429
  %s431 = scalar_lea.vmem [#allocation5], 6
  %v432 = vld [vmem:[%s431] ss:$10 sm:$0x3]
  %s433 = scalar_lea.vmem [#allocation5], 7
  %v434 = vld [vmem:[%s433] ss:$10 sm:$0x3]
  %v435 = vmax.f32 %v432, %v434
  %437 = vrot.lane.b32.xlu0 %v425, 32
  %v438 = vpop.permute.xlu0 %437
  %441 = vrot.lane.b32.xlu0 %v430, 64
  %v442 = vpop.permute.xlu0 %441
  %445 = vrot.lane.b32.xlu0 %v435, 96
  %v446 = vpop.permute.xlu0 %445
  %v448 = vsel %vm303, %v420, %v438
  %vm449 = vcmask 523264
  %v450 = vsel %vm449, %v448, %v442
  %vm451 = vcmask 785408
  %v452 = vsel %vm451, %v450, %v446
  %v453 = vld [vmem:[%s5] sm:$0xff]
  %v454 = vld [vmem:[%s5 + $0x8] sm:$0xff]
  %v455 = vld [vmem:[%s5 + $0x10] sm:$0xff]
  %v456 = vld [vmem:[%s5 + $0x18] sm:$0xff]
  %v457 = vld [vmem:[%s5 + $0x20] sm:$0xff]
  %v458 = vld [vmem:[%s5 + $0x28] sm:$0xff]
  %v459 = vld [vmem:[%s5 + $0x30] sm:$0xff]
  %v460 = vld [vmem:[%s5 + $0x38] sm:$0xff]
  %v461 = vld [vmem:[%s5 + $0x40] sm:$0xff]
  %v462 = vld [vmem:[%s5 + $0x48] sm:$0xff]
  %v463 = vld [vmem:[%s5 + $0x50] sm:$0xff]
  %v464 = vld [vmem:[%s5 + $0x58] sm:$0xff]
  %v465 = vld [vmem:[%s5 + $0x60] sm:$0xff]
  %v466 = vld [vmem:[%s5 + $0x68] sm:$0xff]
  %v467 = vld [vmem:[%s5 + $0x70] sm:$0xff]
  %v468 = vld [vmem:[%s5 + $0x78] sm:$0xff]
  %v469 = vld [vmem:[%s6] sm:$0x1]
  %v471 = vlaneseq
  %v472 = vshrl.u32 %v471, 7
  %v473 = vsub.s32 0, %v472
  %v474 = vrot.slane %v469, %v473
  %476 = vmatprep.subr.mxu0 0.0
  %477 = vmatpush1.msra.mxu0 %v453
  %478 = vmatprep.subr.mxu0 0.0
  %479 = vmatpush1.msra.mxu0 %v454
  %480 = vmatprep.subr.mxu0 0.0
  %481 = vmatpush1.msra.mxu0 %v455
  %482 = vmatprep.subr.mxu0 0.0
  %483 = vmatpush1.msra.mxu0 %v456
  %484 = vmatprep.subr.mxu0 0.0
  %485 = vmatpush1.msra.mxu0 %v457
  %486 = vmatprep.subr.mxu0 0.0
  %487 = vmatpush1.msra.mxu0 %v458
  %488 = vmatprep.subr.mxu0 0.0
  %489 = vmatpush1.msra.mxu0 %v459
  %490 = vmatprep.subr.mxu0 0.0
  %491 = vmatpush1.msra.mxu0 %v460
  %492 = vmatprep.subr.mxu0 0.0
  %493 = vmatpush1.msra.mxu0 %v461
  %494 = vmatprep.subr.mxu0 0.0
  %495 = vmatpush1.msra.mxu0 %v462
  %496 = vmatprep.subr.mxu0 0.0
  %497 = vmatpush1.msra.mxu0 %v463
  %498 = vmatprep.subr.mxu0 0.0
  %499 = vmatpush1.msra.mxu0 %v464
  %500 = vmatprep.subr.mxu0 0.0
  %501 = vmatpush1.msra.mxu0 %v465
  %502 = vmatprep.subr.mxu0 0.0
  %503 = vmatpush1.msra.mxu0 %v466
  %504 = vmatprep.subr.mxu0 0.0
  %505 = vmatpush1.msra.mxu0 %v467
  %506 = vmatprep.subr.mxu0 0.0
  %507 = vmatpush1.msra.mxu0 %v468
  %508 = vmatprep.subr.mxu0 0.0
  %509 = vmatpush1.msra.mxu0 0.0
  %510 = vmatprep.subr.mxu0 0.0
  %511 = vmatpush1.msra.mxu0 0.0
  %512 = vmatprep.subr.mxu0 0.0
  %513 = vmatpush1.msra.mxu0 0.0
  %514 = vmatprep.subr.mxu0 0.0
  %515 = vmatpush1.msra.mxu0 0.0
  %516 = vmatprep.subr.mxu0 0.0
  %517 = vmatpush1.msra.mxu0 0.0
  %518 = vmatprep.subr.mxu0 0.0
  %519 = vmatpush1.msra.mxu0 0.0
  %520 = vmatprep.subr.mxu0 0.0
  %521 = vmatpush1.msra.mxu0 0.0
  %522 = vmatprep.subr.mxu0 0.0
  %523 = vmatpush1.msra.mxu0 0.0
  %524 = vmatprep.subr.mxu0 0.0
  %525 = vmatpush1.msra.mxu0 0.0
  %526 = vmatprep.subr.mxu0 0.0
  %527 = vmatpush1.msra.mxu0 0.0
  %528 = vmatprep.subr.mxu0 0.0
  %529 = vmatpush1.msra.mxu0 0.0
  %530 = vmatprep.subr.mxu0 0.0
  %531 = vmatpush1.msra.mxu0 0.0
  %532 = vmatprep.subr.mxu0 0.0
  %533 = vmatpush1.msra.mxu0 0.0
  %534 = vmatprep.subr.mxu0 0.0
  %535 = vmatpush1.msra.mxu0 0.0
  %536 = vmatprep.subr.mxu0 0.0
  %537 = vmatpush1.msra.mxu0 0.0
  %538 = vmatprep.subr.mxu0 0.0
  %539 = vmatpush1.msra.mxu0 0.0
  %540 = vmatprep.mubr.f32.mxu0 0.0
  %541 = vmatmul.mubr.f32.gmra.mrb[0].mxu0 %v452
  %v542 = vpop.f32.mrb[0].mxu0
  %v543 = vadd.f32 %v474, %v542
  %v544 = vpop.f32.mrb[0].mxu0
  %545 = vdwg.mxu0
  %v546 = vmax.f32 %v543, 0.0
  %v547 = vld [vmem:[%s7] sm:$0x1]
  %v549 = vlaneseq
  %v550 = vshrl.u32 %v549, 7
  %v551 = vsub.s32 0, %v550
  %v552 = vrot.slane %v547, %v551
  %v554 = vmul.f32 %v546, %v552
  %vm555 = vcmask 517120
  %v556 = vsel %vm555, %v554, 0.0
  %557 = vadd.xlane.f32.xlu0 %v556
  %v558 = vpop.xlane.xlu0 %557
  %s559 = sld [smem:[#allocation6]]
  %v560 = vstv %s559
  %v561 = vadd.f32 %v558, %v560
  %vm562 = vcmask 1024
  %563 = vst.msk [vmem:[%s9] sm:$0x3] %vm562, %v561
  // Predicated region
  $region38: #{cnn_regressor_forward.1} parent=0 // pred_check
    _
  $region39: #{cnn_regressor_forward.1} parent=0 // pred_check_branch
    %565 = sbr.rel (0) target = $region41
  $region40: #{cnn_regressor_forward.1} parent=0 // pred_region
    _
  $region41: #{cnn_regressor_forward.1} parent=0 // pred_fallthru
    _
  // Predicated region
  $region42: #{cnn_regressor_forward.1} parent=0 // pred_check
    _
  $region43: #{cnn_regressor_forward.1} parent=0 // pred_check_branch
    %567 = sbr.rel (0) target = $region45
  $region44: #{cnn_regressor_forward.1} parent=0 // pred_region
    _
  $region45: #{cnn_regressor_forward.1} parent=0 // pred_fallthru
    _

</llo_original>
